<compile_context>
chip_gen: v7x
topology: tpu7x:2x2x1
jax: 0.10.0
libtpu: 0.0.40
codegen_flags: <defaults>
</compile_context>

<pallas_src>
import functools

import jax
import jax.numpy as jnp
from jax.experimental import pallas as pl


def _attention_kernel(x_ref, w_ref, out_ref, *, batch, seq):
    """Fused single-head causal attention over the whole batch.

    x_ref   : (B*T, E)   flattened input
    w_ref   : (E, 3*A)   fused [Wq | Wk | Wv] (pre-transposed Linear weights)
    out_ref : (B*T, A)
    """
    B, T = batch, seq
    A = out_ref.shape[1]

    x = x_ref[...]                                   # (B*T, E)
    w = w_ref[...]                                   # (E, 3A)

    # Single MXU pass: all three projections for the whole batch.
    qkv = jnp.dot(x, w, preferred_element_type=jnp.float32)   # (B*T, 3A)

    scale = A ** -0.5
    q = qkv[:, :A] * scale                           # fold 1/sqrt(A) into q
    k = qkv[:, A:2 * A]
    v = qkv[:, 2 * A:]

    # Causal mask, shared across the batch.
    row = jax.lax.broadcasted_iota(jnp.int32, (T, T), 0)
    col = jax.lax.broadcasted_iota(jnp.int32, (T, T), 1)
    causal = row >= col

    outs = []
    for b in range(B):                               # tiny static loop (unrolled)
        qb = q[b * T:(b + 1) * T, :]                 # (T, A)
        kb = k[b * T:(b + 1) * T, :]
        vb = v[b * T:(b + 1) * T, :]

        # Q @ K^T contracted on the last dim of both operands (no transpose).
        scores = jax.lax.dot_general(
            qb, kb, (((1,), (1,)), ((), ())),
            preferred_element_type=jnp.float32)      # (T, T)
        # Every row has its diagonal unmasked, so -inf is safe here.
        scores = jnp.where(causal, scores, -jnp.inf)

        # Softmax with deferred normalization.
        m = jnp.max(scores, axis=-1, keepdims=True)
        e = jnp.exp(scores - m)
        denom = jnp.sum(e, axis=-1, keepdims=True)   # (T, 1)
        acc = jnp.dot(e, vb, preferred_element_type=jnp.float32)  # (T, A)
        outb = acc * pl.reciprocal(denom, approx=False)

        # torch .round(decimals=4) (round-half-to-even, same as jnp.round)
        outs.append(jnp.round(outb * 1e4) * 1e-4)

    out_ref[...] = jnp.concatenate(outs, axis=0)     # single (B*T, A) store


def single_head_attention(embedded, wk_t, wq_t, wv_t):
    """embedded: (B, T, E); w*_t: (E, A) transposed nn.Linear weights."""
    B, T, E = embedded.shape
    A = wk_t.shape[1]

    x2d = embedded.reshape(B * T, E)
    w_qkv = jnp.concatenate([wq_t, wk_t, wv_t], axis=1)    # (E, 3A): [Q | K | V]

    kernel = functools.partial(_attention_kernel, batch=B, seq=T)
    out2d = pl.pallas_call(
        kernel,
        out_shape=jax.ShapeDtypeStruct((B * T, A), jnp.float32),
        in_specs=[
            pl.BlockSpec((B * T, E), lambda: (0, 0)),
            pl.BlockSpec((E, 3 * A), lambda: (0, 0)),
        ],
        out_specs=pl.BlockSpec((B * T, A), lambda: (0, 0)),
    )(x2d, w_qkv)

    return out2d.reshape(B, T, A)


def reference(embedded, wk_t, wq_t, wv_t):
    """Pure-JAX reference for correctness checking."""
    k = embedded @ wk_t
    q = embedded @ wq_t
    v = embedded @ wv_t
    A = k.shape[-1]
    T = k.shape[-2]
    scores = jnp.einsum("btd,bsd->bts", q, k) / (A ** 0.5)
    mask = jnp.tril(jnp.ones((T, T))) == 0
    scores = jnp.where(mask[None], -jnp.inf, scores)
    probs = jax.nn.softmax(scores, axis=-1)
    out = jnp.einsum("bts,bsd->btd", probs, v)
    return jnp.round(out * 1e4) / 1e4


if __name__ == "__main__":
    # Small shapes implied by the module: (B, T, E) input, attention dim A.
    B, T, E, A = 2, 8, 32, 16

    key = jax.random.PRNGKey(0)
    k_emb, k_wk, k_wq, k_wv = jax.random.split(key, 4)

    embedded = jax.random.normal(k_emb, (B, T, E), dtype=jnp.float32)

    # Deterministic init mimicking nn.Linear default: U(-1/sqrt(E), 1/sqrt(E)).
    # nn.Linear stores weight as (A, E); we pass it transposed as (E, A).
    bound = 1.0 / (E ** 0.5)
    wk_t = jax.random.uniform(k_wk, (E, A), jnp.float32, -bound, bound)
    wq_t = jax.random.uniform(k_wq, (E, A), jnp.float32, -bound, bound)
    wv_t = jax.random.uniform(k_wv, (E, A), jnp.float32, -bound, bound)

    out = single_head_attention(embedded, wk_t, wq_t, wv_t)
    out = jax.block_until_ready(out)

    ref = reference(embedded, wk_t, wq_t, wv_t)
    assert out.shape == (B, T, A), out.shape
    assert jnp.allclose(out, ref, atol=1e-4), "mismatch vs reference"

    print("KERNEL_OK")
</pallas_src>

<mosaic_0001>
module attributes {stable_mosaic.version = 11 : i64} {
  func.func @_attention_kernel(%arg0: memref<16x32xf32, #tpu.memory_space<vmem>>, %arg1: memref<32x48xf32, #tpu.memory_space<vmem>>, %arg2: memref<16x16xf32, #tpu.memory_space<vmem>>) attributes {dimension_semantics = [], scalar_prefetch = 0 : i64, scratch_operands = 0 : i64, tpu.core_type = #tpu.core_type<tc>} {
    %c0 = arith.constant 0 : index
    %c0_0 = arith.constant 0 : index
    %0 = vector.load %arg0[%c0, %c0_0] : memref<16x32xf32, #tpu.memory_space<vmem>>, vector<16x32xf32>
    %c0_1 = arith.constant 0 : index
    %c0_2 = arith.constant 0 : index
    %1 = vector.load %arg1[%c0_1, %c0_2] : memref<32x48xf32, #tpu.memory_space<vmem>>, vector<32x48xf32>
    %cst = arith.constant dense<0.000000e+00> : vector<16x48xf32>
    %2 = tpu.matmul %0, %1, %cst {dimension_numbers = #tpu.dot_dimension_numbers<[1], [0], [0], [1], [0, 0, 1, 1], [], []>} : vector<16x32xf32>, vector<32x48xf32>, vector<16x48xf32> -> vector<16x48xf32>
    %3 = vector.extract_strided_slice %2 {offsets = [0, 0], sizes = [16, 16], strides = [1, 1]} : vector<16x48xf32> to vector<16x16xf32>
    %cst_3 = arith.constant 2.500000e-01 : f32
    %4 = vector.broadcast %cst_3 : f32 to vector<16x16xf32>
    %5 = arith.mulf %3, %4 : vector<16x16xf32>
    %6 = vector.extract_strided_slice %2 {offsets = [0, 16], sizes = [16, 16], strides = [1, 1]} : vector<16x48xf32> to vector<16x16xf32>
    %7 = vector.extract_strided_slice %2 {offsets = [0, 32], sizes = [16, 16], strides = [1, 1]} : vector<16x48xf32> to vector<16x16xf32>
    %8 = tpu.iota {dimensions = array<i32: 0>} : vector<8x8xi32>
    %9 = tpu.iota {dimensions = array<i32: 1>} : vector<8x8xi32>
    %10 = arith.cmpi sge, %8, %9 : vector<8x8xi32>
    %11 = vector.extract_strided_slice %5 {offsets = [0, 0], sizes = [8, 16], strides = [1, 1]} : vector<16x16xf32> to vector<8x16xf32>
    %12 = vector.extract_strided_slice %6 {offsets = [0, 0], sizes = [8, 16], strides = [1, 1]} : vector<16x16xf32> to vector<8x16xf32>
    %13 = vector.extract_strided_slice %7 {offsets = [0, 0], sizes = [8, 16], strides = [1, 1]} : vector<16x16xf32> to vector<8x16xf32>
    %cst_4 = arith.constant dense<0.000000e+00> : vector<8x8xf32>
    %14 = tpu.matmul %11, %12, %cst_4 {dimension_numbers = #tpu.dot_dimension_numbers<[1], [1], [0], [0], [0, 0, 1, 0], [], []>} : vector<8x16xf32>, vector<8x16xf32>, vector<8x8xf32> -> vector<8x8xf32>
    %cst_5 = arith.constant 0xFF800000 : f32
    %15 = vector.broadcast %cst_5 : f32 to vector<8x8xf32>
    %16 = arith.select %10, %14, %15 : vector<8x8xi1>, vector<8x8xf32>
    %cst_6 = arith.constant dense<0xFF800000> : vector<8xf32>
    %17 = vector.multi_reduction <maximumf>, %16, %cst_6 [1] : vector<8x8xf32> to vector<8xf32>
    %18 = vector.shape_cast %17 : vector<8xf32> to vector<8x1xf32>
    %19 = vector.broadcast %18 : vector<8x1xf32> to vector<8x8xf32>
    %20 = arith.subf %16, %19 : vector<8x8xf32>
    %21 = math.exp %20 : vector<8x8xf32>
    %cst_7 = arith.constant dense<0.000000e+00> : vector<8xf32>
    %22 = vector.multi_reduction <add>, %21, %cst_7 [1] : vector<8x8xf32> to vector<8xf32>
    %23 = vector.shape_cast %22 : vector<8xf32> to vector<8x1xf32>
    %cst_8 = arith.constant dense<0.000000e+00> : vector<8x16xf32>
    %24 = tpu.matmul %21, %13, %cst_8 {dimension_numbers = #tpu.dot_dimension_numbers<[1], [0], [0], [1], [0, 0, 1, 1], [], []>} : vector<8x8xf32>, vector<8x16xf32>, vector<8x16xf32> -> vector<8x16xf32>
    %25 = tpu.reciprocal %23 : vector<8x1xf32> -> vector<8x1xf32>
    %26 = vector.broadcast %25 : vector<8x1xf32> to vector<8x16xf32>
    %27 = arith.mulf %24, %26 : vector<8x16xf32>
    %cst_9 = arith.constant 1.000000e+04 : f32
    %28 = vector.broadcast %cst_9 : f32 to vector<8x16xf32>
    %29 = arith.mulf %27, %28 : vector<8x16xf32>
    %30 = math.roundeven %29 : vector<8x16xf32>
    %cst_10 = arith.constant 9.99999974E-5 : f32
    %31 = vector.broadcast %cst_10 : f32 to vector<8x16xf32>
    %32 = arith.mulf %30, %31 : vector<8x16xf32>
    %33 = vector.extract_strided_slice %5 {offsets = [8, 0], sizes = [8, 16], strides = [1, 1]} : vector<16x16xf32> to vector<8x16xf32>
    %34 = vector.extract_strided_slice %6 {offsets = [8, 0], sizes = [8, 16], strides = [1, 1]} : vector<16x16xf32> to vector<8x16xf32>
    %35 = vector.extract_strided_slice %7 {offsets = [8, 0], sizes = [8, 16], strides = [1, 1]} : vector<16x16xf32> to vector<8x16xf32>
    %cst_11 = arith.constant dense<0.000000e+00> : vector<8x8xf32>
    %36 = tpu.matmul %33, %34, %cst_11 {dimension_numbers = #tpu.dot_dimension_numbers<[1], [1], [0], [0], [0, 0, 1, 0], [], []>} : vector<8x16xf32>, vector<8x16xf32>, vector<8x8xf32> -> vector<8x8xf32>
    %cst_12 = arith.constant 0xFF800000 : f32
    %37 = vector.broadcast %cst_12 : f32 to vector<8x8xf32>
    %38 = arith.select %10, %36, %37 : vector<8x8xi1>, vector<8x8xf32>
    %cst_13 = arith.constant dense<0xFF800000> : vector<8xf32>
    %39 = vector.multi_reduction <maximumf>, %38, %cst_13 [1] : vector<8x8xf32> to vector<8xf32>
    %40 = vector.shape_cast %39 : vector<8xf32> to vector<8x1xf32>
    %41 = vector.broadcast %40 : vector<8x1xf32> to vector<8x8xf32>
    %42 = arith.subf %38, %41 : vector<8x8xf32>
    %43 = math.exp %42 : vector<8x8xf32>
    %cst_14 = arith.constant dense<0.000000e+00> : vector<8xf32>
    %44 = vector.multi_reduction <add>, %43, %cst_14 [1] : vector<8x8xf32> to vector<8xf32>
    %45 = vector.shape_cast %44 : vector<8xf32> to vector<8x1xf32>
    %cst_15 = arith.constant dense<0.000000e+00> : vector<8x16xf32>
    %46 = tpu.matmul %43, %35, %cst_15 {dimension_numbers = #tpu.dot_dimension_numbers<[1], [0], [0], [1], [0, 0, 1, 1], [], []>} : vector<8x8xf32>, vector<8x16xf32>, vector<8x16xf32> -> vector<8x16xf32>
    %47 = tpu.reciprocal %45 : vector<8x1xf32> -> vector<8x1xf32>
    %48 = vector.broadcast %47 : vector<8x1xf32> to vector<8x16xf32>
    %49 = arith.mulf %46, %48 : vector<8x16xf32>
    %cst_16 = arith.constant 1.000000e+04 : f32
    %50 = vector.broadcast %cst_16 : f32 to vector<8x16xf32>
    %51 = arith.mulf %49, %50 : vector<8x16xf32>
    %52 = math.roundeven %51 : vector<8x16xf32>
    %cst_17 = arith.constant 9.99999974E-5 : f32
    %53 = vector.broadcast %cst_17 : f32 to vector<8x16xf32>
    %54 = arith.mulf %52, %53 : vector<8x16xf32>
    %55 = tpu.concatenate %32, %54 in 0 : vector<8x16xf32>, vector<8x16xf32> -> vector<16x16xf32>
    %c0_18 = arith.constant 0 : index
    %c0_19 = arith.constant 0 : index
    %56 = vector.load %arg2[%c0_18, %c0_19] : memref<16x16xf32, #tpu.memory_space<vmem>>, vector<16x16xf32>
    tpu.vector_store %arg2[%c0_18, %c0_19], %55 {strides = array<i32>} : memref<16x16xf32, #tpu.memory_space<vmem>>, vector<16x16xf32>,
    return
  }
}

</mosaic_0001>

<llo_original>
// kernel: tpu_custom_call.1
$region0: #{tpu_custom_call.1}
  #allocation0 [shape = 'u32[]', space=smem, size = 0x4, offset = 0x4, fixed_abs, tag = 'smem constant byte address 0x4 - core index']
  #allocation1 [shape = 'u32[144,128]{1,0:T(1,128)}', space=vmem, size = 0x12000, scoped, tag = 'internal scratch']
  %s0 = inlined_call_operand.hbm [shape: f32[16,32], index: 0, kind: input, shape index: {}]
  %s1 = inlined_call_operand.hbm [shape: f32[32,48], index: 1, kind: input, shape index: {}]
  %s2 = inlined_call_operand.hbm [shape: f32[16,16], index: 2, kind: output, shape index: {}]
  %s3 = sld [smem:[#allocation0]]
  $region26: #{tpu_custom_call.1} parent=0
    _
  %s5 = ssub.s32 1, %s3
  %s6 = scalar_select 0, %s5, %s3
  $region1: #{tpu_custom_call.1} parent=0
    #allocation2 [shape = 'u8[8192]{0}', space=vmem, size = 0x2000, scoped, tag = 'input window, operand 0, single buffered']
    #allocation3 [shape = 's32[1]{0}', space=sflag, size = 0x4, scoped, tag = 'scoped memory for tpu_custom_call.1']
    #allocation4 [shape = 's32[1]{0}', space=sflag, size = 0x4, scoped, tag = 'scoped memory for tpu_custom_call.1']
    #allocation5 [shape = 'u8[16384]{0}', space=vmem, size = 0x4000, scoped, tag = 'input window, operand 1, single buffered']
    #allocation6 [shape = 's32[1]{0}', space=sflag, size = 0x4, scoped, tag = 'scoped memory for tpu_custom_call.1']
    #allocation7 [shape = 'u8[8192]{0}', space=vmem, size = 0x2000, scoped, tag = 'output window, operand 0, single buffered']
    %7 = vsyncpa [#allocation3], 0
    %8 = vsyncpa [#allocation6], 0
    %9 = vsyncpa [#allocation4], 0
    // Predicated region
    $region2: #{tpu_custom_call.1} parent=1 // pred_check
      _
    $region3: #{tpu_custom_call.1} parent=1 // pred_check_branch
      %11 = sbr.rel (0) target = $region5
    $region4: #{tpu_custom_call.1} parent=1 // pred_region
      %s13 = ssub.s32 256, 256
      %14 = vsyncadd [#allocation3], %s13
      %s15 = sshll.u32 [#allocation2], 4
      %s16 = int_to_ptr.vmem [resolvable:$true] %s15
      %21 = dma.hbm_to_vmem [thread:$0]  %s0, 256, %s16, [#allocation3], 128, 128, 8
    $region5: #{tpu_custom_call.1} parent=1 // pred_fallthru
      _
    // Predicated region
    $region6: #{tpu_custom_call.1} parent=1 // pred_check
      _
    $region7: #{tpu_custom_call.1} parent=1 // pred_check_branch
      %23 = sbr.rel (0) target = $region9
    $region8: #{tpu_custom_call.1} parent=1 // pred_region
      %s25 = ssub.s32 512, 512
      %26 = vsyncadd [#allocation6], %s25
      %s27 = sshll.u32 [#allocation5], 4
      %s28 = int_to_ptr.vmem [resolvable:$true] %s27
      %33 = dma.hbm_to_vmem [thread:$0]  %s1, 512, %s28, [#allocation6], 128, 128, 8
    $region9: #{tpu_custom_call.1} parent=1 // pred_fallthru
      _
    // Predicated region
    $region10: #{tpu_custom_call.1} parent=1 // pred_check
      _
    $region11: #{tpu_custom_call.1} parent=1 // pred_check_branch
      %35 = sbr.rel (0) target = $region13
    $region12: #{tpu_custom_call.1} parent=1 // pred_region
      %36 = dma.done [#allocation3], 256
    $region13: #{tpu_custom_call.1} parent=1 // pred_fallthru
      _
    // Predicated region
    $region14: #{tpu_custom_call.1} parent=1 // pred_check
      _
    $region15: #{tpu_custom_call.1} parent=1 // pred_check_branch
      %38 = sbr.rel (0) target = $region17
    $region16: #{tpu_custom_call.1} parent=1 // pred_region
      %39 = dma.done [#allocation6], 512
    $region17: #{tpu_custom_call.1} parent=1 // pred_fallthru
      _
    %v40 = vld [vmem:[#allocation2] sm:$0xff]
    %v41 = vld [vmem:[#allocation2 + $0x8] sm:$0xff]
    %v42 = vld [vmem:[#allocation5] sm:$0xff]
    %v43 = vld [vmem:[#allocation5 + $0x8] sm:$0xff]
    %v44 = vld [vmem:[#allocation5 + $0x10] sm:$0xff]
    %v45 = vld [vmem:[#allocation5 + $0x18] sm:$0xff]
    %vm46 = vcmask 261120
    %v48 = vsel %vm46, %v40, 0
    %v51 = vsel %vm46, %v41, 0
    %53 = vmatprep.subr.mxu0 0.0
    %54 = vmatpush1.msra.mxu0 %v42
    %55 = vmatprep.subr.mxu0 0.0
    %56 = vmatpush1.msra.mxu0 %v43
    %57 = vmatprep.subr.mxu0 0.0
    %58 = vmatpush1.msra.mxu0 %v44
    %59 = vmatprep.subr.mxu0 0.0
    %60 = vmatpush1.msra.mxu0 %v45
    %61 = vmatprep.subr.mxu0 0.0
    %62 = vmatpush1.msra.mxu0 0.0
    %63 = vmatprep.subr.mxu0 0.0
    %64 = vmatpush1.msra.mxu0 0.0
    %65 = vmatprep.subr.mxu0 0.0
    %66 = vmatpush1.msra.mxu0 0.0
    %67 = vmatprep.subr.mxu0 0.0
    %68 = vmatpush1.msra.mxu0 0.0
    %69 = vmatprep.subr.mxu0 0.0
    %70 = vmatpush1.msra.mxu0 0.0
    %71 = vmatprep.subr.mxu0 0.0
    %72 = vmatpush1.msra.mxu0 0.0
    %73 = vmatprep.subr.mxu0 0.0
    %74 = vmatpush1.msra.mxu0 0.0
    %75 = vmatprep.subr.mxu0 0.0
    %76 = vmatpush1.msra.mxu0 0.0
    %77 = vmatprep.subr.mxu0 0.0
    %78 = vmatpush1.msra.mxu0 0.0
    %79 = vmatprep.subr.mxu0 0.0
    %80 = vmatpush1.msra.mxu0 0.0
    %81 = vmatprep.subr.mxu0 0.0
    %82 = vmatpush1.msra.mxu0 0.0
    %83 = vmatprep.subr.mxu0 0.0
    %84 = vmatpush1.msra.mxu0 0.0
    %85 = vmatprep.subr.mxu0 0.0
    %86 = vmatpush1.msra.mxu0 0.0
    %87 = vmatprep.subr.mxu0 0.0
    %88 = vmatpush1.msra.mxu0 0.0
    %89 = vmatprep.subr.mxu0 0.0
    %90 = vmatpush1.msra.mxu0 0.0
    %91 = vmatprep.subr.mxu0 0.0
    %92 = vmatpush1.msra.mxu0 0.0
    %93 = vmatprep.subr.mxu0 0.0
    %94 = vmatpush1.msra.mxu0 0.0
    %95 = vmatprep.subr.mxu0 0.0
    %96 = vmatpush1.msra.mxu0 0.0
    %97 = vmatprep.subr.mxu0 0.0
    %98 = vmatpush1.msra.mxu0 0.0
    %99 = vmatprep.subr.mxu0 0.0
    %100 = vmatpush1.msra.mxu0 0.0
    %101 = vmatprep.subr.mxu0 0.0
    %102 = vmatpush1.msra.mxu0 0.0
    %103 = vmatprep.subr.mxu0 0.0
    %104 = vmatpush1.msra.mxu0 0.0
    %105 = vmatprep.subr.mxu0 0.0
    %106 = vmatpush1.msra.mxu0 0.0
    %107 = vmatprep.subr.mxu0 0.0
    %108 = vmatpush1.msra.mxu0 0.0
    %109 = vmatprep.subr.mxu0 0.0
    %110 = vmatpush1.msra.mxu0 0.0
    %111 = vmatprep.subr.mxu0 0.0
    %112 = vmatpush1.msra.mxu0 0.0
    %113 = vmatprep.subr.mxu0 0.0
    %114 = vmatpush1.msra.mxu0 0.0
    %115 = vmatprep.subr.mxu0 0.0
    %116 = vmatpush1.msra.mxu0 0.0
    %117 = vmatprep.mubr.f32.mxu0 0.0
    %118 = vmatmul.mubr.f32.gmra.mrb[0].mxu0 %v48
    %v119 = vpop.f32.mrb[0].mxu0
    %v120 = vadd.f32 0.0, %v119
    %v121 = vpop.f32.mrb[0].mxu0
    %122 = vmatprep.mubr.f32.mxu0 0.0
    %123 = vmatmul.mubr.f32.gmra.mrb[0].mxu0 %v51
    %v124 = vpop.f32.mrb[0].mxu0
    %v125 = vadd.f32 0.0, %v124
    %v126 = vpop.f32.mrb[0].mxu0
    %127 = vdwg.mxu0
    %v128 = vmul.f32 %v120, 0.25
    %v129 = vmul.f32 %v125, 0.25
    %v130 = vlaneseq
    %v131 = vshrl.u32 %v130, 7
    %v132 = vlaneseq
    %v133 = vand.u32 %v132, 127
    %vm134 = vcmp.ge.s32.totalorder %v131, %v133
    %136 = vrot.lane.b32.xlu0 %v120, 112
    %v137 = vpop.permute.xlu0 %136
    %vm138 = vcmask 130048
    %v140 = vsel %vm138, %v128, 0
    %v142 = vsel %vm138, %v137, 0
    %144 = vmatprep.subr.mxu0 0.0
    %145 = vmatpush1.xpose.msra.mxu0 %v142
    %146 = vmatprep.subr.mxu0 0.0
    %147 = vmatpush1.xpose.msra.mxu0 0.0
    %148 = vmatprep.subr.mxu0 0.0
    %149 = vmatpush1.xpose.msra.mxu0 0.0
    %150 = vmatprep.subr.mxu0 0.0
    %151 = vmatpush1.xpose.msra.mxu0 0.0
    %152 = vmatprep.subr.mxu0 0.0
    %153 = vmatpush1.xpose.msra.mxu0 0.0
    %154 = vmatprep.subr.mxu0 0.0
    %155 = vmatpush1.xpose.msra.mxu0 0.0
    %156 = vmatprep.subr.mxu0 0.0
    %157 = vmatpush1.xpose.msra.mxu0 0.0
    %158 = vmatprep.subr.mxu0 0.0
    %159 = vmatpush1.xpose.msra.mxu0 0.0
    %160 = vmatprep.subr.mxu0 0.0
    %161 = vmatpush1.xpose.msra.mxu0 0.0
    %162 = vmatprep.subr.mxu0 0.0
    %163 = vmatpush1.xpose.msra.mxu0 0.0
    %164 = vmatprep.subr.mxu0 0.0
    %165 = vmatpush1.xpose.msra.mxu0 0.0
    %166 = vmatprep.subr.mxu0 0.0
    %167 = vmatpush1.xpose.msra.mxu0 0.0
    %168 = vmatprep.subr.mxu0 0.0
    %169 = vmatpush1.xpose.msra.mxu0 0.0
    %170 = vmatprep.subr.mxu0 0.0
    %171 = vmatpush1.xpose.msra.mxu0 0.0
    %172 = vmatprep.subr.mxu0 0.0
    %173 = vmatpush1.xpose.msra.mxu0 0.0
    %174 = vmatprep.subr.mxu0 0.0
    %175 = vmatpush1.xpose.msra.mxu0 0.0
    %176 = vmatprep.subr.mxu0 0.0
    %177 = vmatpush1.xpose.msra.mxu0 0.0
    %178 = vmatprep.subr.mxu0 0.0
    %179 = vmatpush1.xpose.msra.mxu0 0.0
    %180 = vmatprep.subr.mxu0 0.0
    %181 = vmatpush1.xpose.msra.mxu0 0.0
    %182 = vmatprep.subr.mxu0 0.0
    %183 = vmatpush1.xpose.msra.mxu0 0.0
    %184 = vmatprep.subr.mxu0 0.0
    %185 = vmatpush1.xpose.msra.mxu0 0.0
    %186 = vmatprep.subr.mxu0 0.0
    %187 = vmatpush1.xpose.msra.mxu0 0.0
    %188 = vmatprep.subr.mxu0 0.0
    %189 = vmatpush1.xpose.msra.mxu0 0.0
    %190 = vmatprep.subr.mxu0 0.0
    %191 = vmatpush1.xpose.msra.mxu0 0.0
    %192 = vmatprep.subr.mxu0 0.0
    %193 = vmatpush1.xpose.msra.mxu0 0.0
    %194 = vmatprep.subr.mxu0 0.0
    %195 = vmatpush1.xpose.msra.mxu0 0.0
    %196 = vmatprep.subr.mxu0 0.0
    %197 = vmatpush1.xpose.msra.mxu0 0.0
    %198 = vmatprep.subr.mxu0 0.0
    %199 = vmatpush1.xpose.msra.mxu0 0.0
    %200 = vmatprep.subr.mxu0 0.0
    %201 = vmatpush1.xpose.msra.mxu0 0.0
    %202 = vmatprep.subr.mxu0 0.0
    %203 = vmatpush1.xpose.msra.mxu0 0.0
    %204 = vmatprep.subr.mxu0 0.0
    %205 = vmatpush1.xpose.msra.mxu0 0.0
    %206 = vmatprep.subr.mxu0 0.0
    %207 = vmatpush1.xpose.msra.mxu0 0.0
    %208 = vmatprep.mubr.f32.mxu0 0.0
    %209 = vmatmul.mubr.f32.gmra.mrb[0].mxu0 %v140
    %v210 = vpop.f32.mrb[0].mxu0
    %v211 = vadd.f32 0.0, %v210
    %v212 = vpop.f32.mrb[0].mxu0
    %213 = vdwg.mxu0
    %v214 = vsel %vm134, %v211, -inf
    %vm215 = vcmask 64512
    %v216 = vsel %vm215, %v214, -inf
    %217 = vmax.xlane.f32.xlu0 %v216
    %v218 = vpop.xlane.xlu0 %217
    %v219 = vsub.f32 %v214, %v218
    %v220 = vmul.f32 %v219, 1.442695
    %v221 = vpow.pop %v220
    %v222 = vsel %vm215, %v221, 0.0
    %223 = vadd.xlane.f32.xlu0 %v222
    %v224 = vpop.xlane.xlu0 %223
    %225 = vrot.lane.b32.xlu0 %v120, 96
    %v226 = vpop.permute.xlu0 %225
    %v229 = vsel %vm215, %v221, 0
    %231 = vmatprep.subr.mxu0 0.0
    %232 = vmatpush1.msra.mxu0 %v226
    %233 = vmatprep.subr.mxu0 0.0
    %234 = vmatpush1.msra.mxu0 0.0
    %235 = vmatprep.subr.mxu0 0.0
    %236 = vmatpush1.msra.mxu0 0.0
    %237 = vmatprep.subr.mxu0 0.0
    %238 = vmatpush1.msra.mxu0 0.0
    %239 = vmatprep.subr.mxu0 0.0
    %240 = vmatpush1.msra.mxu0 0.0
    %241 = vmatprep.subr.mxu0 0.0
    %242 = vmatpush1.msra.mxu0 0.0
    %243 = vmatprep.subr.mxu0 0.0
    %244 = vmatpush1.msra.mxu0 0.0
    %245 = vmatprep.subr.mxu0 0.0
    %246 = vmatpush1.msra.mxu0 0.0
    %247 = vmatprep.subr.mxu0 0.0
    %248 = vmatpush1.msra.mxu0 0.0
    %249 = vmatprep.subr.mxu0 0.0
    %250 = vmatpush1.msra.mxu0 0.0
    %251 = vmatprep.subr.mxu0 0.0
    %252 = vmatpush1.msra.mxu0 0.0
    %253 = vmatprep.subr.mxu0 0.0
    %254 = vmatpush1.msra.mxu0 0.0
    %255 = vmatprep.subr.mxu0 0.0
    %256 = vmatpush1.msra.mxu0 0.0
    %257 = vmatprep.subr.mxu0 0.0
    %258 = vmatpush1.msra.mxu0 0.0
    %259 = vmatprep.subr.mxu0 0.0
    %260 = vmatpush1.msra.mxu0 0.0
    %261 = vmatprep.subr.mxu0 0.0
    %262 = vmatpush1.msra.mxu0 0.0
    %263 = vmatprep.subr.mxu0 0.0
    %264 = vmatpush1.msra.mxu0 0.0
    %265 = vmatprep.subr.mxu0 0.0
    %266 = vmatpush1.msra.mxu0 0.0
    %267 = vmatprep.subr.mxu0 0.0
    %268 = vmatpush1.msra.mxu0 0.0
    %269 = vmatprep.subr.mxu0 0.0
    %270 = vmatpush1.msra.mxu0 0.0
    %271 = vmatprep.subr.mxu0 0.0
    %272 = vmatpush1.msra.mxu0 0.0
    %273 = vmatprep.subr.mxu0 0.0
    %274 = vmatpush1.msra.mxu0 0.0
    %275 = vmatprep.subr.mxu0 0.0
    %276 = vmatpush1.msra.mxu0 0.0
    %277 = vmatprep.subr.mxu0 0.0
    %278 = vmatpush1.msra.mxu0 0.0
    %279 = vmatprep.subr.mxu0 0.0
    %280 = vmatpush1.msra.mxu0 0.0
    %281 = vmatprep.subr.mxu0 0.0
    %282 = vmatpush1.msra.mxu0 0.0
    %283 = vmatprep.subr.mxu0 0.0
    %284 = vmatpush1.msra.mxu0 0.0
    %285 = vmatprep.subr.mxu0 0.0
    %286 = vmatpush1.msra.mxu0 0.0
    %287 = vmatprep.subr.mxu0 0.0
    %288 = vmatpush1.msra.mxu0 0.0
    %289 = vmatprep.subr.mxu0 0.0
    %290 = vmatpush1.msra.mxu0 0.0
    %291 = vmatprep.subr.mxu0 0.0
    %292 = vmatpush1.msra.mxu0 0.0
    %293 = vmatprep.subr.mxu0 0.0
    %294 = vmatpush1.msra.mxu0 0.0
    %295 = vmatprep.mubr.f32.mxu0 0.0
    %296 = vmatmul.mubr.f32.gmra.mrb[0].mxu0 %v229
    %v297 = vpop.f32.mrb[0].mxu0
    %v298 = vadd.f32 0.0, %v297
    %v299 = vpop.f32.mrb[0].mxu0
    %300 = vdwg.mxu0
    %v301 = vrcp.pop %v224
    %v302 = vmul.f32 %v298, %v301
    %v303 = vmul.f32 %v302, 10000.0
    %v304 = vround.ne.pseudo %v303
    %v305 = vmul.f32 %v304, 0.0001
    %307 = vrot.lane.b32.xlu0 %v125, 112
    %v308 = vpop.permute.xlu0 %307
    %v310 = vsel %vm138, %v129, 0
    %v312 = vsel %vm138, %v308, 0
    %314 = vmatprep.subr.mxu0 0.0
    %315 = vmatpush1.xpose.msra.mxu0 %v312
    %316 = vmatprep.subr.mxu0 0.0
    %317 = vmatpush1.xpose.msra.mxu0 0.0
    %318 = vmatprep.subr.mxu0 0.0
    %319 = vmatpush1.xpose.msra.mxu0 0.0
    %320 = vmatprep.subr.mxu0 0.0
    %321 = vmatpush1.xpose.msra.mxu0 0.0
    %322 = vmatprep.subr.mxu0 0.0
    %323 = vmatpush1.xpose.msra.mxu0 0.0
    %324 = vmatprep.subr.mxu0 0.0
    %325 = vmatpush1.xpose.msra.mxu0 0.0
    %326 = vmatprep.subr.mxu0 0.0
    %327 = vmatpush1.xpose.msra.mxu0 0.0
    %328 = vmatprep.subr.mxu0 0.0
    %329 = vmatpush1.xpose.msra.mxu0 0.0
    %330 = vmatprep.subr.mxu0 0.0
    %331 = vmatpush1.xpose.msra.mxu0 0.0
    %332 = vmatprep.subr.mxu0 0.0
    %333 = vmatpush1.xpose.msra.mxu0 0.0
    %334 = vmatprep.subr.mxu0 0.0
    %335 = vmatpush1.xpose.msra.mxu0 0.0
    %336 = vmatprep.subr.mxu0 0.0
    %337 = vmatpush1.xpose.msra.mxu0 0.0
    %338 = vmatprep.subr.mxu0 0.0
    %339 = vmatpush1.xpose.msra.mxu0 0.0
    %340 = vmatprep.subr.mxu0 0.0
    %341 = vmatpush1.xpose.msra.mxu0 0.0
    %342 = vmatprep.subr.mxu0 0.0
    %343 = vmatpush1.xpose.msra.mxu0 0.0
    %344 = vmatprep.subr.mxu0 0.0
    %345 = vmatpush1.xpose.msra.mxu0 0.0
    %346 = vmatprep.subr.mxu0 0.0
    %347 = vmatpush1.xpose.msra.mxu0 0.0
    %348 = vmatprep.subr.mxu0 0.0
    %349 = vmatpush1.xpose.msra.mxu0 0.0
    %350 = vmatprep.subr.mxu0 0.0
    %351 = vmatpush1.xpose.msra.mxu0 0.0
    %352 = vmatprep.subr.mxu0 0.0
    %353 = vmatpush1.xpose.msra.mxu0 0.0
    %354 = vmatprep.subr.mxu0 0.0
    %355 = vmatpush1.xpose.msra.mxu0 0.0
    %356 = vmatprep.subr.mxu0 0.0
    %357 = vmatpush1.xpose.msra.mxu0 0.0
    %358 = vmatprep.subr.mxu0 0.0
    %359 = vmatpush1.xpose.msra.mxu0 0.0
    %360 = vmatprep.subr.mxu0 0.0
    %361 = vmatpush1.xpose.msra.mxu0 0.0
    %362 = vmatprep.subr.mxu0 0.0
    %363 = vmatpush1.xpose.msra.mxu0 0.0
    %364 = vmatprep.subr.mxu0 0.0
    %365 = vmatpush1.xpose.msra.mxu0 0.0
    %366 = vmatprep.subr.mxu0 0.0
    %367 = vmatpush1.xpose.msra.mxu0 0.0
    %368 = vmatprep.subr.mxu0 0.0
    %369 = vmatpush1.xpose.msra.mxu0 0.0
    %370 = vmatprep.subr.mxu0 0.0
    %371 = vmatpush1.xpose.msra.mxu0 0.0
    %372 = vmatprep.subr.mxu0 0.0
    %373 = vmatpush1.xpose.msra.mxu0 0.0
    %374 = vmatprep.subr.mxu0 0.0
    %375 = vmatpush1.xpose.msra.mxu0 0.0
    %376 = vmatprep.subr.mxu0 0.0
    %377 = vmatpush1.xpose.msra.mxu0 0.0
    %378 = vmatprep.mubr.f32.mxu0 0.0
    %379 = vmatmul.mubr.f32.gmra.mrb[0].mxu0 %v310
    %v380 = vpop.f32.mrb[0].mxu0
    %v381 = vadd.f32 0.0, %v380
    %v382 = vpop.f32.mrb[0].mxu0
    %383 = vdwg.mxu0
    %v384 = vsel %vm134, %v381, -inf
    %v385 = vsel %vm215, %v384, -inf
    %386 = vmax.xlane.f32.xlu0 %v385
    %v387 = vpop.xlane.xlu0 %386
    %v388 = vsub.f32 %v384, %v387
    %v389 = vmul.f32 %v388, 1.442695
    %v390 = vpow.pop %v389
    %v391 = vsel %vm215, %v390, 0.0
    %392 = vadd.xlane.f32.xlu0 %v391
    %v393 = vpop.xlane.xlu0 %392
    %394 = vrot.lane.b32.xlu0 %v125, 96
    %v395 = vpop.permute.xlu0 %394
    %v398 = vsel %vm215, %v390, 0
    %400 = vmatprep.subr.mxu0 0.0
    %401 = vmatpush1.msra.mxu0 %v395
    %402 = vmatprep.subr.mxu0 0.0
    %403 = vmatpush1.msra.mxu0 0.0
    %404 = vmatprep.subr.mxu0 0.0
    %405 = vmatpush1.msra.mxu0 0.0
    %406 = vmatprep.subr.mxu0 0.0
    %407 = vmatpush1.msra.mxu0 0.0
    %408 = vmatprep.subr.mxu0 0.0
    %409 = vmatpush1.msra.mxu0 0.0
    %410 = vmatprep.subr.mxu0 0.0
    %411 = vmatpush1.msra.mxu0 0.0
    %412 = vmatprep.subr.mxu0 0.0
    %413 = vmatpush1.msra.mxu0 0.0
    %414 = vmatprep.subr.mxu0 0.0
    %415 = vmatpush1.msra.mxu0 0.0
    %416 = vmatprep.subr.mxu0 0.0
    %417 = vmatpush1.msra.mxu0 0.0
    %418 = vmatprep.subr.mxu0 0.0
    %419 = vmatpush1.msra.mxu0 0.0
    %420 = vmatprep.subr.mxu0 0.0
    %421 = vmatpush1.msra.mxu0 0.0
    %422 = vmatprep.subr.mxu0 0.0
    %423 = vmatpush1.msra.mxu0 0.0
    %424 = vmatprep.subr.mxu0 0.0
    %425 = vmatpush1.msra.mxu0 0.0
    %426 = vmatprep.subr.mxu0 0.0
    %427 = vmatpush1.msra.mxu0 0.0
    %428 = vmatprep.subr.mxu0 0.0
    %429 = vmatpush1.msra.mxu0 0.0
    %430 = vmatprep.subr.mxu0 0.0
    %431 = vmatpush1.msra.mxu0 0.0
    %432 = vmatprep.subr.mxu0 0.0
    %433 = vmatpush1.msra.mxu0 0.0
    %434 = vmatprep.subr.mxu0 0.0
    %435 = vmatpush1.msra.mxu0 0.0
    %436 = vmatprep.subr.mxu0 0.0
    %437 = vmatpush1.msra.mxu0 0.0
    %438 = vmatprep.subr.mxu0 0.0
    %439 = vmatpush1.msra.mxu0 0.0
    %440 = vmatprep.subr.mxu0 0.0
    %441 = vmatpush1.msra.mxu0 0.0
    %442 = vmatprep.subr.mxu0 0.0
    %443 = vmatpush1.msra.mxu0 0.0
    %444 = vmatprep.subr.mxu0 0.0
    %445 = vmatpush1.msra.mxu0 0.0
    %446 = vmatprep.subr.mxu0 0.0
    %447 = vmatpush1.msra.mxu0 0.0
    %448 = vmatprep.subr.mxu0 0.0
    %449 = vmatpush1.msra.mxu0 0.0
    %450 = vmatprep.subr.mxu0 0.0
    %451 = vmatpush1.msra.mxu0 0.0
    %452 = vmatprep.subr.mxu0 0.0
    %453 = vmatpush1.msra.mxu0 0.0
    %454 = vmatprep.subr.mxu0 0.0
    %455 = vmatpush1.msra.mxu0 0.0
    %456 = vmatprep.subr.mxu0 0.0
    %457 = vmatpush1.msra.mxu0 0.0
    %458 = vmatprep.subr.mxu0 0.0
    %459 = vmatpush1.msra.mxu0 0.0
    %460 = vmatprep.subr.mxu0 0.0
    %461 = vmatpush1.msra.mxu0 0.0
    %462 = vmatprep.subr.mxu0 0.0
    %463 = vmatpush1.msra.mxu0 0.0
    %464 = vmatprep.mubr.f32.mxu0 0.0
    %465 = vmatmul.mubr.f32.gmra.mrb[0].mxu0 %v398
    %v466 = vpop.f32.mrb[0].mxu0
    %v467 = vadd.f32 0.0, %v466
    %v468 = vpop.f32.mrb[0].mxu0
    %469 = vdwg.mxu0
    %v470 = vrcp.pop %v393
    %v471 = vmul.f32 %v467, %v470
    %v472 = vmul.f32 %v471, 10000.0
    %v473 = vround.ne.pseudo %v472
    %v474 = vmul.f32 %v473, 0.0001
    %475 = vst.msk [vmem:[#allocation7] sm:$0xff] %vm138, %v305
    %476 = vst.msk [vmem:[#allocation7 + $0x8] sm:$0xff] %vm138, %v474
    // Predicated region
    $region18: #{tpu_custom_call.1} parent=1 // pred_check
      _
    $region19: #{tpu_custom_call.1} parent=1 // pred_check_branch
      %478 = sbr.rel (0) target = $region21
    $region20: #{tpu_custom_call.1} parent=1 // pred_region
      %s480 = ssub.s32 256, 256
      %481 = vsyncadd [#allocation4], %s480
      %s482 = sshll.u32 [#allocation7], 4
      %s483 = int_to_ptr.vmem [resolvable:$true] %s482
      %488 = dma.vmem_to_hbm [thread:$0]  %s483, 256, %s2, [#allocation4], 128, 128, 8
    $region21: #{tpu_custom_call.1} parent=1 // pred_fallthru
      _
    // Predicated region
    $region22: #{tpu_custom_call.1} parent=1 // pred_check
      _
    $region23: #{tpu_custom_call.1} parent=1 // pred_check_branch
      %490 = sbr.rel (0) target = $region25
    $region24: #{tpu_custom_call.1} parent=1 // pred_region
      %491 = dma.done [#allocation4], 256
    $region25: #{tpu_custom_call.1} parent=1 // pred_fallthru
      _
    %492 = vsyncpa [#allocation3], 1
    %493 = vsyncpa [#allocation6], 1
    %494 = vsyncpa [#allocation4], 1

</llo_original>
